<compile_context>
chip_gen: v7x
topology: tpu7x:2x2x1
jax: 0.10.0
libtpu: 0.0.40
codegen_flags: <defaults>
</compile_context>

<pallas_src>
import functools

import numpy as np
import jax
import jax.numpy as jnp
from jax.experimental import pallas as pl
from jax.experimental.pallas import tpu as pltpu

GAMMA = 0.7  # mutiaxis_norm default


def _pool_matrix(D, H, W):
    """(D*H*W, D+H+W) matrix P s.t. x2d @ P == concat([pool_D, pool_H, pool_W], -1)."""
    L = D + H + W
    P = np.zeros((D * H * W, L), dtype=np.float32)
    idx = np.arange(D * H * W)
    d = idx // (H * W)
    h = (idx // W) % H
    w = idx % W
    P[idx, d] = 1.0 / (H * W)          # adaptive_avg_pool3d -> (D, 1, 1)
    P[idx, D + h] = 1.0 / (D * W)      # adaptive_avg_pool3d -> (1, H, 1)
    P[idx, D + H + w] = 1.0 / (D * H)  # adaptive_avg_pool3d -> (1, 1, W)
    return P


def _decoder_shuffle_kernel(x_ref, p_ref, w_ref, out_ref, *, C, Lout):
    """x_ref:   (2C, D*H*W)  stacked [f; m], channel-major, lane-dense
       p_ref:   (D*H*W, L)   constant pooling matrix (L = D+H+W)
       w_ref:   (OC, 3C+1)   conv taps (tap-major) with bias as last column
       out_ref: (OC, 2*Lout) [f | m] along the lane axis (Lout = L-2)."""
    # --- three adaptive avg-pools + concat == one MXU matmul ---
    cat = jnp.dot(x_ref[...], p_ref[...], preferred_element_type=jnp.float32)  # (2C, L)

    # --- mutiaxis_norm, applied per tensor (rows [0:C]=f, rows [C:2C]=m) ---
    # gamma*(x*nx) + (1-gamma)*x  ==  x * (gamma*nx + (1-gamma))
    gx = jnp.sqrt(jnp.sum(cat * cat, axis=1, keepdims=True))                   # (2C, 1)
    gx_f = gx[0:C]
    gx_m = gx[C:2 * C]
    inv_f = pl.reciprocal(jnp.sum(gx_f, axis=0, keepdims=True) * (1.0 / C) + 1e-6,
                          approx=True)                                          # (1, 1)
    inv_m = pl.reciprocal(jnp.sum(gx_m, axis=0, keepdims=True) * (1.0 / C) + 1e-6,
                          approx=True)
    nx = jnp.concatenate([gx_f * inv_f, gx_m * inv_m], axis=0)                  # (2C, 1)
    normed = cat * (GAMMA * nx + (1.0 - GAMMA))                                 # (2C, L)

    nf = normed[0:C, :]        # (C, L)  f channels
    nm = normed[C:2 * C, :]    # (C, L)  m channels

    # --- Conv1d(C->OC, k=3, valid): single im2col matmul, bias via ones row ---
    def tap(t):  # (C, 2*Lout): f then m along the lane axis
        return jnp.concatenate([nf[:, t:t + Lout], nm[:, t:t + Lout]], axis=1)

    ones_row = jnp.ones((1, 2 * Lout), dtype=jnp.float32)
    b_mat = jnp.concatenate([tap(0), tap(1), tap(2), ones_row], axis=0)         # (3C+1, 2*Lout)
    out_ref[...] = jnp.dot(w_ref[...], b_mat, preferred_element_type=jnp.float32)


@functools.partial(jax.jit, static_argnames=("dowm_scale",))
def get_mutiaxis_decoder_shuffle_fea(f_decode_fea, m_decode_fea, conv_w, conv_b,
                                     dowm_scale=16):
    """f_decode_fea, m_decode_fea: (1, C, D, H, W) f32
       conv_w: (OC, C, 3) f32, conv_b: (OC,) f32  (Cat_conv's Conv1d params)
       Returns (f_cat, m_cat), each (1, OC, D+H+W-2)."""
    N, C, D, H, W = f_decode_fea.shape
    assert N == 1 and m_decode_fea.shape == f_decode_fea.shape
    # Adaptive pooling is only exact when spatial dims equal the pool targets.
    assert (D, H, W) == (160 // dowm_scale, 192 // dowm_scale, 128 // dowm_scale), \
        "adaptive_avg_pool3d is only exact when spatial dims equal the pool targets"

    OC = conv_w.shape[0]
    L = D + H + W
    Lout = L - 2

    # Stacked, lane-dense input: rows [0:C] = f channels, rows [C:2C] = m channels.
    x2d = jnp.concatenate([f_decode_fea, m_decode_fea], axis=0).reshape(2 * C, D * H * W)
    # Constant pooling matrix (trace-time constant; folded by XLA).
    pool_mat = jnp.asarray(_pool_matrix(D, H, W))
    # Conv taps, tap-major, with the bias folded in as the last column.
    w_aug = jnp.concatenate(
        [jnp.transpose(conv_w, (0, 2, 1)).reshape(OC, 3 * C), conv_b.reshape(OC, 1)],
        axis=1)                                                                  # (OC, 3C+1)

    out = pl.pallas_call(
        functools.partial(_decoder_shuffle_kernel, C=C, Lout=Lout),
        out_shape=jax.ShapeDtypeStruct((OC, 2 * Lout), jnp.float32),
        in_specs=[pl.BlockSpec(memory_space=pltpu.MemorySpace.VMEM)] * 3,
        out_specs=pl.BlockSpec(memory_space=pltpu.MemorySpace.VMEM),
    )(x2d, pool_mat, w_aug)

    f_out = out[:, :Lout][None]     # (1, OC, Lout)
    m_out = out[:, Lout:][None]     # (1, OC, Lout)
    return f_out, m_out


def _reference(f_decode_fea, m_decode_fea, conv_w, conv_b):
    """Pure-JAX mirror of the PyTorch forward (for correctness check)."""
    def one(x5):
        x = x5[0]                                  # (C, D, H, W)
        a2 = jnp.mean(x, axis=(2, 3)).T            # (D, C)
        a3 = jnp.mean(x, axis=(1, 3)).T            # (H, C)
        a4 = jnp.mean(x, axis=(1, 2)).T            # (W, C)
        cat = jnp.concatenate([a2, a3, a4], axis=0)[None]         # (1, L, C)
        gx = jnp.sqrt(jnp.sum(cat * cat, axis=1, keepdims=True))  # (1, 1, C)
        nx = gx / (jnp.mean(gx, axis=-1, keepdims=True) + 1e-6)
        cat = GAMMA * (cat * nx) + (1.0 - GAMMA) * cat
        xc = jnp.transpose(cat, (0, 2, 1))                        # (1, C, L)
        out = jax.lax.conv_general_dilated(
            xc, conv_w, window_strides=(1,), padding="VALID",
            dimension_numbers=("NCH", "OIH", "NCH"))
        return out + conv_b[None, :, None]
    return one(f_decode_fea), one(m_decode_fea)


if __name__ == "__main__":
    # Small shapes: in_dim (channels) = 8, dowm_scale = 16 ->
    # spatial = (160/16, 192/16, 128/16) = (10, 12, 8), batch = 1.
    C = 8
    D, H, W = 10, 12, 8
    OC = int(C / 4 * 16)           # Cat_conv: int(in_dim / 4 * 16) = 32

    key = jax.random.PRNGKey(0)
    kf, km, kw, kb = jax.random.split(key, 4)
    f_decode = jax.random.normal(kf, (1, C, D, H, W), dtype=jnp.float32)
    m_decode = jax.random.normal(km, (1, C, D, H, W), dtype=jnp.float32)
    conv_w = jax.random.normal(kw, (OC, C, 3), dtype=jnp.float32) * 0.1
    conv_b = jax.random.normal(kb, (OC,), dtype=jnp.float32) * 0.1

    f_out, m_out = get_mutiaxis_decoder_shuffle_fea(f_decode, m_decode,
                                                    conv_w, conv_b)
    jax.block_until_ready((f_out, m_out))

    f_ref, m_ref = _reference(f_decode, m_decode, conv_w, conv_b)
    assert f_out.shape == (1, OC, D + H + W - 2), f_out.shape
    assert m_out.shape == (1, OC, D + H + W - 2), m_out.shape
    # tolerance slightly relaxed vs 1e-4 to cover the EUP approx reciprocal
    assert jnp.allclose(f_out, f_ref, atol=1e-3, rtol=1e-3)
    assert jnp.allclose(m_out, m_ref, atol=1e-3, rtol=1e-3)

    print("KERNEL_OK")
</pallas_src>

<mosaic_0001>
module attributes {stable_mosaic.version = 11 : i64} {
  func.func @_decoder_shuffle_kernel(%arg0: memref<16x960xf32, #tpu.memory_space<vmem>>, %arg1: memref<960x30xf32, #tpu.memory_space<vmem>>, %arg2: memref<32x25xf32, #tpu.memory_space<vmem>>, %arg3: memref<32x56xf32, #tpu.memory_space<vmem>>) attributes {dimension_semantics = [], scalar_prefetch = 0 : i64, scratch_operands = 0 : i64, tpu.core_type = #tpu.core_type<tc>} {
    %c0 = arith.constant 0 : index
    %c0_0 = arith.constant 0 : index
    %0 = vector.load %arg0[%c0, %c0_0] : memref<16x960xf32, #tpu.memory_space<vmem>>, vector<16x960xf32>
    %c0_1 = arith.constant 0 : index
    %c0_2 = arith.constant 0 : index
    %1 = vector.load %arg1[%c0_1, %c0_2] : memref<960x30xf32, #tpu.memory_space<vmem>>, vector<960x30xf32>
    %cst = arith.constant dense<0.000000e+00> : vector<16x30xf32>
    %2 = tpu.matmul %0, %1, %cst {dimension_numbers = #tpu.dot_dimension_numbers<[1], [0], [0], [1], [0, 0, 1, 1], [], []>} : vector<16x960xf32>, vector<960x30xf32>, vector<16x30xf32> -> vector<16x30xf32>
    %3 = arith.mulf %2, %2 : vector<16x30xf32>
    %cst_3 = arith.constant dense<0.000000e+00> : vector<16xf32>
    %4 = vector.multi_reduction <add>, %3, %cst_3 [1] : vector<16x30xf32> to vector<16xf32>
    %5 = vector.shape_cast %4 : vector<16xf32> to vector<16x1xf32>
    %6 = math.sqrt %5 : vector<16x1xf32>
    %7 = vector.extract_strided_slice %6 {offsets = [0, 0], sizes = [8, 1], strides = [1, 1]} : vector<16x1xf32> to vector<8x1xf32>
    %8 = vector.extract_strided_slice %6 {offsets = [8, 0], sizes = [8, 1], strides = [1, 1]} : vector<16x1xf32> to vector<8x1xf32>
    %cst_4 = arith.constant dense<0.000000e+00> : vector<1xf32>
    %9 = vector.multi_reduction <add>, %7, %cst_4 [0] : vector<8x1xf32> to vector<1xf32>
    %10 = vector.shape_cast %9 : vector<1xf32> to vector<1x1xf32>
    %cst_5 = arith.constant 1.250000e-01 : f32
    %11 = vector.broadcast %cst_5 : f32 to vector<1x1xf32>
    %12 = arith.mulf %10, %11 : vector<1x1xf32>
    %cst_6 = arith.constant 9.99999997E-7 : f32
    %13 = vector.broadcast %cst_6 : f32 to vector<1x1xf32>
    %14 = arith.addf %12, %13 : vector<1x1xf32>
    %15 = tpu.reciprocal %14 {approx = true} : vector<1x1xf32> -> vector<1x1xf32>
    %cst_7 = arith.constant dense<0.000000e+00> : vector<1xf32>
    %16 = vector.multi_reduction <add>, %8, %cst_7 [0] : vector<8x1xf32> to vector<1xf32>
    %17 = vector.shape_cast %16 : vector<1xf32> to vector<1x1xf32>
    %cst_8 = arith.constant 1.250000e-01 : f32
    %18 = vector.broadcast %cst_8 : f32 to vector<1x1xf32>
    %19 = arith.mulf %17, %18 : vector<1x1xf32>
    %cst_9 = arith.constant 9.99999997E-7 : f32
    %20 = vector.broadcast %cst_9 : f32 to vector<1x1xf32>
    %21 = arith.addf %19, %20 : vector<1x1xf32>
    %22 = tpu.reciprocal %21 {approx = true} : vector<1x1xf32> -> vector<1x1xf32>
    %23 = vector.broadcast %15 : vector<1x1xf32> to vector<8x1xf32>
    %24 = arith.mulf %7, %23 : vector<8x1xf32>
    %25 = vector.broadcast %22 : vector<1x1xf32> to vector<8x1xf32>
    %26 = arith.mulf %8, %25 : vector<8x1xf32>
    %27 = tpu.concatenate %24, %26 in 0 : vector<8x1xf32>, vector<8x1xf32> -> vector<16x1xf32>
    %cst_10 = arith.constant 0.699999988 : f32
    %28 = vector.broadcast %cst_10 : f32 to vector<16x1xf32>
    %29 = arith.mulf %28, %27 : vector<16x1xf32>
    %cst_11 = arith.constant 3.000000e-01 : f32
    %30 = vector.broadcast %cst_11 : f32 to vector<16x1xf32>
    %31 = arith.addf %29, %30 : vector<16x1xf32>
    %32 = vector.broadcast %31 : vector<16x1xf32> to vector<16x30xf32>
    %33 = arith.mulf %2, %32 : vector<16x30xf32>
    %34 = vector.extract_strided_slice %33 {offsets = [0, 0], sizes = [8, 30], strides = [1, 1]} : vector<16x30xf32> to vector<8x30xf32>
    %35 = vector.extract_strided_slice %33 {offsets = [8, 0], sizes = [8, 30], strides = [1, 1]} : vector<16x30xf32> to vector<8x30xf32>
    %cst_12 = arith.constant 1.000000e+00 : f32
    %36 = vector.broadcast %cst_12 : f32 to vector<1x56xf32>
    %37 = vector.extract_strided_slice %34 {offsets = [0, 0], sizes = [8, 28], strides = [1, 1]} : vector<8x30xf32> to vector<8x28xf32>
    %38 = vector.extract_strided_slice %35 {offsets = [0, 0], sizes = [8, 28], strides = [1, 1]} : vector<8x30xf32> to vector<8x28xf32>
    %39 = tpu.concatenate %37, %38 in 1 : vector<8x28xf32>, vector<8x28xf32> -> vector<8x56xf32>
    %40 = vector.extract_strided_slice %34 {offsets = [0, 1], sizes = [8, 28], strides = [1, 1]} : vector<8x30xf32> to vector<8x28xf32>
    %41 = vector.extract_strided_slice %35 {offsets = [0, 1], sizes = [8, 28], strides = [1, 1]} : vector<8x30xf32> to vector<8x28xf32>
    %42 = tpu.concatenate %40, %41 in 1 : vector<8x28xf32>, vector<8x28xf32> -> vector<8x56xf32>
    %43 = vector.extract_strided_slice %34 {offsets = [0, 2], sizes = [8, 28], strides = [1, 1]} : vector<8x30xf32> to vector<8x28xf32>
    %44 = vector.extract_strided_slice %35 {offsets = [0, 2], sizes = [8, 28], strides = [1, 1]} : vector<8x30xf32> to vector<8x28xf32>
    %45 = tpu.concatenate %43, %44 in 1 : vector<8x28xf32>, vector<8x28xf32> -> vector<8x56xf32>
    %46 = tpu.concatenate %39, %42, %45, %36 in 0 : vector<8x56xf32>, vector<8x56xf32>, vector<8x56xf32>, vector<1x56xf32> -> vector<25x56xf32>
    %c0_13 = arith.constant 0 : index
    %c0_14 = arith.constant 0 : index
    %47 = vector.load %arg2[%c0_13, %c0_14] : memref<32x25xf32, #tpu.memory_space<vmem>>, vector<32x25xf32>
    %cst_15 = arith.constant dense<0.000000e+00> : vector<32x56xf32>
    %48 = tpu.matmul %47, %46, %cst_15 {dimension_numbers = #tpu.dot_dimension_numbers<[1], [0], [0], [1], [0, 0, 1, 1], [], []>} : vector<32x25xf32>, vector<25x56xf32>, vector<32x56xf32> -> vector<32x56xf32>
    %c0_16 = arith.constant 0 : index
    %c0_17 = arith.constant 0 : index
    %49 = vector.load %arg3[%c0_16, %c0_17] : memref<32x56xf32, #tpu.memory_space<vmem>>, vector<32x56xf32>
    tpu.vector_store %arg3[%c0_16, %c0_17], %48 {strides = array<i32>} : memref<32x56xf32, #tpu.memory_space<vmem>>, vector<32x56xf32>,
    return
  }
}

</mosaic_0001>

<llo_original>
// kernel: get_mutiaxis_decoder_shuffle_fea.1
$region0: #{get_mutiaxis_decoder_shuffle_fea.1}
  #allocation0 [shape = 'u32[]', space=smem, size = 0x4, offset = 0x4, fixed_abs, tag = 'smem constant byte address 0x4 - core index']
  #allocation1 [shape = 'u32[144,128]{1,0:T(1,128)}', space=vmem, size = 0x12000, scoped, tag = 'internal scratch']
  %s0 = inlined_call_operand.vmem [shape: f32[16,960], index: 0, kind: input, shape index: {}]
  %s1 = inlined_call_operand.vmem [shape: f32[960,30], index: 1, kind: input, shape index: {}]
  %s2 = inlined_call_operand.vmem [shape: f32[32,25], index: 2, kind: input, shape index: {}]
  %s3 = inlined_call_operand.vmem [shape: f32[32,56], index: 3, kind: output, shape index: {}]
  %s4 = sld [smem:[#allocation0]]
  $region22: #{get_mutiaxis_decoder_shuffle_fea.1} parent=0
    _
  %s6 = ssub.s32 1, %s4
  %s7 = scalar_select 0, %s6, %s4
  // Predicated region
  $region2: #{get_mutiaxis_decoder_shuffle_fea.1} parent=0 // pred_check
    _
  $region3: #{get_mutiaxis_decoder_shuffle_fea.1} parent=0 // pred_check_branch
    %9 = sbr.rel (0) target = $region5
  $region4: #{get_mutiaxis_decoder_shuffle_fea.1} parent=0 // pred_region
    _
  $region5: #{get_mutiaxis_decoder_shuffle_fea.1} parent=0 // pred_fallthru
    _
  // Predicated region
  $region6: #{get_mutiaxis_decoder_shuffle_fea.1} parent=0 // pred_check
    _
  $region7: #{get_mutiaxis_decoder_shuffle_fea.1} parent=0 // pred_check_branch
    %11 = sbr.rel (0) target = $region9
  $region8: #{get_mutiaxis_decoder_shuffle_fea.1} parent=0 // pred_region
    _
  $region9: #{get_mutiaxis_decoder_shuffle_fea.1} parent=0 // pred_fallthru
    _
  // Predicated region
  $region10: #{get_mutiaxis_decoder_shuffle_fea.1} parent=0 // pred_check
    _
  $region11: #{get_mutiaxis_decoder_shuffle_fea.1} parent=0 // pred_check_branch
    %13 = sbr.rel (0) target = $region13
  $region12: #{get_mutiaxis_decoder_shuffle_fea.1} parent=0 // pred_region
    _
  $region13: #{get_mutiaxis_decoder_shuffle_fea.1} parent=0 // pred_fallthru
    _
  %v14 = vld [vmem:[%s0] sm:$0xff]
  %v15 = vld [vmem:[%s0 + $0x8] sm:$0xff]
  %v16 = vld [vmem:[%s0 + $0x10] sm:$0xff]
  %v17 = vld [vmem:[%s0 + $0x18] sm:$0xff]
  %v18 = vld [vmem:[%s0 + $0x20] sm:$0xff]
  %v19 = vld [vmem:[%s0 + $0x28] sm:$0xff]
  %v20 = vld [vmem:[%s0 + $0x30] sm:$0xff]
  %v21 = vld [vmem:[%s0 + $0x38] sm:$0xff]
  %v22 = vld [vmem:[%s0 + $0x40] sm:$0xff]
  %v23 = vld [vmem:[%s0 + $0x48] sm:$0xff]
  %v24 = vld [vmem:[%s0 + $0x50] sm:$0xff]
  %v25 = vld [vmem:[%s0 + $0x58] sm:$0xff]
  %v26 = vld [vmem:[%s0 + $0x60] sm:$0xff]
  %v27 = vld [vmem:[%s0 + $0x68] sm:$0xff]
  %v28 = vld [vmem:[%s0 + $0x70] sm:$0xff]
  %v29 = vld [vmem:[%s0 + $0x78] sm:$0xff]
  %v30 = vld [vmem:[%s1] sm:$0xff]
  %v31 = vld [vmem:[%s1 + $0x8] sm:$0xff]
  %v32 = vld [vmem:[%s1 + $0x10] sm:$0xff]
  %v33 = vld [vmem:[%s1 + $0x18] sm:$0xff]
  %v34 = vld [vmem:[%s1 + $0x20] sm:$0xff]
  %v35 = vld [vmem:[%s1 + $0x28] sm:$0xff]
  %v36 = vld [vmem:[%s1 + $0x30] sm:$0xff]
  %v37 = vld [vmem:[%s1 + $0x38] sm:$0xff]
  %v38 = vld [vmem:[%s1 + $0x40] sm:$0xff]
  %v39 = vld [vmem:[%s1 + $0x48] sm:$0xff]
  %v40 = vld [vmem:[%s1 + $0x50] sm:$0xff]
  %v41 = vld [vmem:[%s1 + $0x58] sm:$0xff]
  %v42 = vld [vmem:[%s1 + $0x60] sm:$0xff]
  %v43 = vld [vmem:[%s1 + $0x68] sm:$0xff]
  %v44 = vld [vmem:[%s1 + $0x70] sm:$0xff]
  %v45 = vld [vmem:[%s1 + $0x78] sm:$0xff]
  %v46 = vld [vmem:[%s1 + $0x80] sm:$0xff]
  %v47 = vld [vmem:[%s1 + $0x88] sm:$0xff]
  %v48 = vld [vmem:[%s1 + $0x90] sm:$0xff]
  %v49 = vld [vmem:[%s1 + $0x98] sm:$0xff]
  %v50 = vld [vmem:[%s1 + $0xa0] sm:$0xff]
  %v51 = vld [vmem:[%s1 + $0xa8] sm:$0xff]
  %v52 = vld [vmem:[%s1 + $0xb0] sm:$0xff]
  %v53 = vld [vmem:[%s1 + $0xb8] sm:$0xff]
  %v54 = vld [vmem:[%s1 + $0xc0] sm:$0xff]
  %v55 = vld [vmem:[%s1 + $0xc8] sm:$0xff]
  %v56 = vld [vmem:[%s1 + $0xd0] sm:$0xff]
  %v57 = vld [vmem:[%s1 + $0xd8] sm:$0xff]
  %v58 = vld [vmem:[%s1 + $0xe0] sm:$0xff]
  %v59 = vld [vmem:[%s1 + $0xe8] sm:$0xff]
  %v60 = vld [vmem:[%s1 + $0xf0] sm:$0xff]
  %v61 = vld [vmem:[%s1 + $0xf8] sm:$0xff]
  %v62 = vld [vmem:[%s1 + $0x100] sm:$0xff]
  %v63 = vld [vmem:[%s1 + $0x108] sm:$0xff]
  %v64 = vld [vmem:[%s1 + $0x110] sm:$0xff]
  %v65 = vld [vmem:[%s1 + $0x118] sm:$0xff]
  %v66 = vld [vmem:[%s1 + $0x120] sm:$0xff]
  %v67 = vld [vmem:[%s1 + $0x128] sm:$0xff]
  %v68 = vld [vmem:[%s1 + $0x130] sm:$0xff]
  %v69 = vld [vmem:[%s1 + $0x138] sm:$0xff]
  %v70 = vld [vmem:[%s1 + $0x140] sm:$0xff]
  %v71 = vld [vmem:[%s1 + $0x148] sm:$0xff]
  %v72 = vld [vmem:[%s1 + $0x150] sm:$0xff]
  %v73 = vld [vmem:[%s1 + $0x158] sm:$0xff]
  %v74 = vld [vmem:[%s1 + $0x160] sm:$0xff]
  %v75 = vld [vmem:[%s1 + $0x168] sm:$0xff]
  %v76 = vld [vmem:[%s1 + $0x170] sm:$0xff]
  %v77 = vld [vmem:[%s1 + $0x178] sm:$0xff]
  %v78 = vld [vmem:[%s1 + $0x180] sm:$0xff]
  %v79 = vld [vmem:[%s1 + $0x188] sm:$0xff]
  %v80 = vld [vmem:[%s1 + $0x190] sm:$0xff]
  %v81 = vld [vmem:[%s1 + $0x198] sm:$0xff]
  %v82 = vld [vmem:[%s1 + $0x1a0] sm:$0xff]
  %v83 = vld [vmem:[%s1 + $0x1a8] sm:$0xff]
  %v84 = vld [vmem:[%s1 + $0x1b0] sm:$0xff]
  %v85 = vld [vmem:[%s1 + $0x1b8] sm:$0xff]
  %v86 = vld [vmem:[%s1 + $0x1c0] sm:$0xff]
  %v87 = vld [vmem:[%s1 + $0x1c8] sm:$0xff]
  %v88 = vld [vmem:[%s1 + $0x1d0] sm:$0xff]
  %v89 = vld [vmem:[%s1 + $0x1d8] sm:$0xff]
  %v90 = vld [vmem:[%s1 + $0x1e0] sm:$0xff]
  %v91 = vld [vmem:[%s1 + $0x1e8] sm:$0xff]
  %v92 = vld [vmem:[%s1 + $0x1f0] sm:$0xff]
  %v93 = vld [vmem:[%s1 + $0x1f8] sm:$0xff]
  %v94 = vld [vmem:[%s1 + $0x200] sm:$0xff]
  %v95 = vld [vmem:[%s1 + $0x208] sm:$0xff]
  %v96 = vld [vmem:[%s1 + $0x210] sm:$0xff]
  %v97 = vld [vmem:[%s1 + $0x218] sm:$0xff]
  %v98 = vld [vmem:[%s1 + $0x220] sm:$0xff]
  %v99 = vld [vmem:[%s1 + $0x228] sm:$0xff]
  %v100 = vld [vmem:[%s1 + $0x230] sm:$0xff]
  %v101 = vld [vmem:[%s1 + $0x238] sm:$0xff]
  %v102 = vld [vmem:[%s1 + $0x240] sm:$0xff]
  %v103 = vld [vmem:[%s1 + $0x248] sm:$0xff]
  %v104 = vld [vmem:[%s1 + $0x250] sm:$0xff]
  %v105 = vld [vmem:[%s1 + $0x258] sm:$0xff]
  %v106 = vld [vmem:[%s1 + $0x260] sm:$0xff]
  %v107 = vld [vmem:[%s1 + $0x268] sm:$0xff]
  %v108 = vld [vmem:[%s1 + $0x270] sm:$0xff]
  %v109 = vld [vmem:[%s1 + $0x278] sm:$0xff]
  %v110 = vld [vmem:[%s1 + $0x280] sm:$0xff]
  %v111 = vld [vmem:[%s1 + $0x288] sm:$0xff]
  %v112 = vld [vmem:[%s1 + $0x290] sm:$0xff]
  %v113 = vld [vmem:[%s1 + $0x298] sm:$0xff]
  %v114 = vld [vmem:[%s1 + $0x2a0] sm:$0xff]
  %v115 = vld [vmem:[%s1 + $0x2a8] sm:$0xff]
  %v116 = vld [vmem:[%s1 + $0x2b0] sm:$0xff]
  %v117 = vld [vmem:[%s1 + $0x2b8] sm:$0xff]
  %v118 = vld [vmem:[%s1 + $0x2c0] sm:$0xff]
  %v119 = vld [vmem:[%s1 + $0x2c8] sm:$0xff]
  %v120 = vld [vmem:[%s1 + $0x2d0] sm:$0xff]
  %v121 = vld [vmem:[%s1 + $0x2d8] sm:$0xff]
  %v122 = vld [vmem:[%s1 + $0x2e0] sm:$0xff]
  %v123 = vld [vmem:[%s1 + $0x2e8] sm:$0xff]
  %v124 = vld [vmem:[%s1 + $0x2f0] sm:$0xff]
  %v125 = vld [vmem:[%s1 + $0x2f8] sm:$0xff]
  %v126 = vld [vmem:[%s1 + $0x300] sm:$0xff]
  %v127 = vld [vmem:[%s1 + $0x308] sm:$0xff]
  %v128 = vld [vmem:[%s1 + $0x310] sm:$0xff]
  %v129 = vld [vmem:[%s1 + $0x318] sm:$0xff]
  %v130 = vld [vmem:[%s1 + $0x320] sm:$0xff]
  %v131 = vld [vmem:[%s1 + $0x328] sm:$0xff]
  %v132 = vld [vmem:[%s1 + $0x330] sm:$0xff]
  %v133 = vld [vmem:[%s1 + $0x338] sm:$0xff]
  %v134 = vld [vmem:[%s1 + $0x340] sm:$0xff]
  %v135 = vld [vmem:[%s1 + $0x348] sm:$0xff]
  %v136 = vld [vmem:[%s1 + $0x350] sm:$0xff]
  %v137 = vld [vmem:[%s1 + $0x358] sm:$0xff]
  %v138 = vld [vmem:[%s1 + $0x360] sm:$0xff]
  %v139 = vld [vmem:[%s1 + $0x368] sm:$0xff]
  %v140 = vld [vmem:[%s1 + $0x370] sm:$0xff]
  %v141 = vld [vmem:[%s1 + $0x378] sm:$0xff]
  %v142 = vld [vmem:[%s1 + $0x380] sm:$0xff]
  %v143 = vld [vmem:[%s1 + $0x388] sm:$0xff]
  %v144 = vld [vmem:[%s1 + $0x390] sm:$0xff]
  %v145 = vld [vmem:[%s1 + $0x398] sm:$0xff]
  %v146 = vld [vmem:[%s1 + $0x3a0] sm:$0xff]
  %v147 = vld [vmem:[%s1 + $0x3a8] sm:$0xff]
  %v148 = vld [vmem:[%s1 + $0x3b0] sm:$0xff]
  %v149 = vld [vmem:[%s1 + $0x3b8] sm:$0xff]
  %vm150 = vcmask 523264
  %v152 = vsel %vm150, %v21, 0
  %v155 = vsel %vm150, %v29, 0
  %157 = vmatprep.subr.mxu0 0.0
  %158 = vmatpush1.msra.mxu0 %v30
  %159 = vmatprep.subr.mxu0 0.0
  %160 = vmatpush1.msra.mxu0 %v31
  %161 = vmatprep.subr.mxu0 0.0
  %162 = vmatpush1.msra.mxu0 %v32
  %163 = vmatprep.subr.mxu0 0.0
  %164 = vmatpush1.msra.mxu0 %v33
  %165 = vmatprep.subr.mxu0 0.0
  %166 = vmatpush1.msra.mxu0 %v34
  %167 = vmatprep.subr.mxu0 0.0
  %168 = vmatpush1.msra.mxu0 %v35
  %169 = vmatprep.subr.mxu0 0.0
  %170 = vmatpush1.msra.mxu0 %v36
  %171 = vmatprep.subr.mxu0 0.0
  %172 = vmatpush1.msra.mxu0 %v37
  %173 = vmatprep.subr.mxu0 0.0
  %174 = vmatpush1.msra.mxu0 %v38
  %175 = vmatprep.subr.mxu0 0.0
  %176 = vmatpush1.msra.mxu0 %v39
  %177 = vmatprep.subr.mxu0 0.0
  %178 = vmatpush1.msra.mxu0 %v40
  %179 = vmatprep.subr.mxu0 0.0
  %180 = vmatpush1.msra.mxu0 %v41
  %181 = vmatprep.subr.mxu0 0.0
  %182 = vmatpush1.msra.mxu0 %v42
  %183 = vmatprep.subr.mxu0 0.0
  %184 = vmatpush1.msra.mxu0 %v43
  %185 = vmatprep.subr.mxu0 0.0
  %186 = vmatpush1.msra.mxu0 %v44
  %187 = vmatprep.subr.mxu0 0.0
  %188 = vmatpush1.msra.mxu0 %v45
  %189 = vmatprep.subr.mxu0 0.0
  %190 = vmatpush1.msra.mxu0 %v46
  %191 = vmatprep.subr.mxu0 0.0
  %192 = vmatpush1.msra.mxu0 %v47
  %193 = vmatprep.subr.mxu0 0.0
  %194 = vmatpush1.msra.mxu0 %v48
  %195 = vmatprep.subr.mxu0 0.0
  %196 = vmatpush1.msra.mxu0 %v49
  %197 = vmatprep.subr.mxu0 0.0
  %198 = vmatpush1.msra.mxu0 %v50
  %199 = vmatprep.subr.mxu0 0.0
  %200 = vmatpush1.msra.mxu0 %v51
  %201 = vmatprep.subr.mxu0 0.0
  %202 = vmatpush1.msra.mxu0 %v52
  %203 = vmatprep.subr.mxu0 0.0
  %204 = vmatpush1.msra.mxu0 %v53
  %205 = vmatprep.subr.mxu0 0.0
  %206 = vmatpush1.msra.mxu0 %v54
  %207 = vmatprep.subr.mxu0 0.0
  %208 = vmatpush1.msra.mxu0 %v55
  %209 = vmatprep.subr.mxu0 0.0
  %210 = vmatpush1.msra.mxu0 %v56
  %211 = vmatprep.subr.mxu0 0.0
  %212 = vmatpush1.msra.mxu0 %v57
  %213 = vmatprep.subr.mxu0 0.0
  %214 = vmatpush1.msra.mxu0 %v58
  %215 = vmatprep.subr.mxu0 0.0
  %216 = vmatpush1.msra.mxu0 %v59
  %217 = vmatprep.subr.mxu0 0.0
  %218 = vmatpush1.msra.mxu0 %v60
  %219 = vmatprep.subr.mxu0 0.0
  %220 = vmatpush1.msra.mxu0 %v61
  %221 = vmatprep.mubr.f32.mxu0 %v15
  %222 = vmatmul.mubr.f32.gmra.mrb[0].mxu0 %v14
  %v223 = vpop.f32.mrb[0].mxu0
  %v224 = vadd.f32 0.0, %v223
  %v225 = vpop.f32.mrb[0].mxu0
  %226 = vmatprep.mubr.f32.mxu0 %v23
  %227 = vmatmul.mubr.f32.gmra.mrb[0].mxu0 %v22
  %v228 = vpop.f32.mrb[0].mxu0
  %v229 = vadd.f32 0.0, %v228
  %v230 = vpop.f32.mrb[0].mxu0
  %231 = vdwg.mxu0
  %232 = vmatprep.subr.mxu0 0.0
  %233 = vmatpush1.msra.mxu0 %v62
  %234 = vmatprep.subr.mxu0 0.0
  %235 = vmatpush1.msra.mxu0 %v63
  %236 = vmatprep.subr.mxu0 0.0
  %237 = vmatpush1.msra.mxu0 %v64
  %238 = vmatprep.subr.mxu0 0.0
  %239 = vmatpush1.msra.mxu0 %v65
  %240 = vmatprep.subr.mxu0 0.0
  %241 = vmatpush1.msra.mxu0 %v66
  %242 = vmatprep.subr.mxu0 0.0
  %243 = vmatpush1.msra.mxu0 %v67
  %244 = vmatprep.subr.mxu0 0.0
  %245 = vmatpush1.msra.mxu0 %v68
  %246 = vmatprep.subr.mxu0 0.0
  %247 = vmatpush1.msra.mxu0 %v69
  %248 = vmatprep.subr.mxu0 0.0
  %249 = vmatpush1.msra.mxu0 %v70
  %250 = vmatprep.subr.mxu0 0.0
  %251 = vmatpush1.msra.mxu0 %v71
  %252 = vmatprep.subr.mxu0 0.0
  %253 = vmatpush1.msra.mxu0 %v72
  %254 = vmatprep.subr.mxu0 0.0
  %255 = vmatpush1.msra.mxu0 %v73
  %256 = vmatprep.subr.mxu0 0.0
  %257 = vmatpush1.msra.mxu0 %v74
  %258 = vmatprep.subr.mxu0 0.0
  %259 = vmatpush1.msra.mxu0 %v75
  %260 = vmatprep.subr.mxu0 0.0
  %261 = vmatpush1.msra.mxu0 %v76
  %262 = vmatprep.subr.mxu0 0.0
  %263 = vmatpush1.msra.mxu0 %v77
  %264 = vmatprep.subr.mxu0 0.0
  %265 = vmatpush1.msra.mxu0 %v78
  %266 = vmatprep.subr.mxu0 0.0
  %267 = vmatpush1.msra.mxu0 %v79
  %268 = vmatprep.subr.mxu0 0.0
  %269 = vmatpush1.msra.mxu0 %v80
  %270 = vmatprep.subr.mxu0 0.0
  %271 = vmatpush1.msra.mxu0 %v81
  %272 = vmatprep.subr.mxu0 0.0
  %273 = vmatpush1.msra.mxu0 %v82
  %274 = vmatprep.subr.mxu0 0.0
  %275 = vmatpush1.msra.mxu0 %v83
  %276 = vmatprep.subr.mxu0 0.0
  %277 = vmatpush1.msra.mxu0 %v84
  %278 = vmatprep.subr.mxu0 0.0
  %279 = vmatpush1.msra.mxu0 %v85
  %280 = vmatprep.subr.mxu0 0.0
  %281 = vmatpush1.msra.mxu0 %v86
  %282 = vmatprep.subr.mxu0 0.0
  %283 = vmatpush1.msra.mxu0 %v87
  %284 = vmatprep.subr.mxu0 0.0
  %285 = vmatpush1.msra.mxu0 %v88
  %286 = vmatprep.subr.mxu0 0.0
  %287 = vmatpush1.msra.mxu0 %v89
  %288 = vmatprep.subr.mxu0 0.0
  %289 = vmatpush1.msra.mxu0 %v90
  %290 = vmatprep.subr.mxu0 0.0
  %291 = vmatpush1.msra.mxu0 %v91
  %292 = vmatprep.subr.mxu0 0.0
  %293 = vmatpush1.msra.mxu0 %v92
  %294 = vmatprep.subr.mxu0 0.0
  %295 = vmatpush1.msra.mxu0 %v93
  %296 = vmatprep.mubr.f32.mxu0 %v17
  %297 = vmatmul.mubr.f32.gmra.mrb[0].mxu0 %v16
  %v298 = vpop.f32.mrb[0].mxu0
  %v299 = vadd.f32 %v224, %v298
  %v300 = vpop.f32.mrb[0].mxu0
  %301 = vmatprep.mubr.f32.mxu0 %v25
  %302 = vmatmul.mubr.f32.gmra.mrb[0].mxu0 %v24
  %v303 = vpop.f32.mrb[0].mxu0
  %v304 = vadd.f32 %v229, %v303
  %v305 = vpop.f32.mrb[0].mxu0
  %306 = vdwg.mxu0
  %307 = vmatprep.subr.mxu0 0.0
  %308 = vmatpush1.msra.mxu0 %v94
  %309 = vmatprep.subr.mxu0 0.0
  %310 = vmatpush1.msra.mxu0 %v95
  %311 = vmatprep.subr.mxu0 0.0
  %312 = vmatpush1.msra.mxu0 %v96
  %313 = vmatprep.subr.mxu0 0.0
  %314 = vmatpush1.msra.mxu0 %v97
  %315 = vmatprep.subr.mxu0 0.0
  %316 = vmatpush1.msra.mxu0 %v98
  %317 = vmatprep.subr.mxu0 0.0
  %318 = vmatpush1.msra.mxu0 %v99
  %319 = vmatprep.subr.mxu0 0.0
  %320 = vmatpush1.msra.mxu0 %v100
  %321 = vmatprep.subr.mxu0 0.0
  %322 = vmatpush1.msra.mxu0 %v101
  %323 = vmatprep.subr.mxu0 0.0
  %324 = vmatpush1.msra.mxu0 %v102
  %325 = vmatprep.subr.mxu0 0.0
  %326 = vmatpush1.msra.mxu0 %v103
  %327 = vmatprep.subr.mxu0 0.0
  %328 = vmatpush1.msra.mxu0 %v104
  %329 = vmatprep.subr.mxu0 0.0
  %330 = vmatpush1.msra.mxu0 %v105
  %331 = vmatprep.subr.mxu0 0.0
  %332 = vmatpush1.msra.mxu0 %v106
  %333 = vmatprep.subr.mxu0 0.0
  %334 = vmatpush1.msra.mxu0 %v107
  %335 = vmatprep.subr.mxu0 0.0
  %336 = vmatpush1.msra.mxu0 %v108
  %337 = vmatprep.subr.mxu0 0.0
  %338 = vmatpush1.msra.mxu0 %v109
  %339 = vmatprep.subr.mxu0 0.0
  %340 = vmatpush1.msra.mxu0 %v110
  %341 = vmatprep.subr.mxu0 0.0
  %342 = vmatpush1.msra.mxu0 %v111
  %343 = vmatprep.subr.mxu0 0.0
  %344 = vmatpush1.msra.mxu0 %v112
  %345 = vmatprep.subr.mxu0 0.0
  %346 = vmatpush1.msra.mxu0 %v113
  %347 = vmatprep.subr.mxu0 0.0
  %348 = vmatpush1.msra.mxu0 %v114
  %349 = vmatprep.subr.mxu0 0.0
  %350 = vmatpush1.msra.mxu0 %v115
  %351 = vmatprep.subr.mxu0 0.0
  %352 = vmatpush1.msra.mxu0 %v116
  %353 = vmatprep.subr.mxu0 0.0
  %354 = vmatpush1.msra.mxu0 %v117
  %355 = vmatprep.subr.mxu0 0.0
  %356 = vmatpush1.msra.mxu0 %v118
  %357 = vmatprep.subr.mxu0 0.0
  %358 = vmatpush1.msra.mxu0 %v119
  %359 = vmatprep.subr.mxu0 0.0
  %360 = vmatpush1.msra.mxu0 %v120
  %361 = vmatprep.subr.mxu0 0.0
  %362 = vmatpush1.msra.mxu0 %v121
  %363 = vmatprep.subr.mxu0 0.0
  %364 = vmatpush1.msra.mxu0 %v122
  %365 = vmatprep.subr.mxu0 0.0
  %366 = vmatpush1.msra.mxu0 %v123
  %367 = vmatprep.subr.mxu0 0.0
  %368 = vmatpush1.msra.mxu0 %v124
  %369 = vmatprep.subr.mxu0 0.0
  %370 = vmatpush1.msra.mxu0 %v125
  %371 = vmatprep.mubr.f32.mxu0 %v19
  %372 = vmatmul.mubr.f32.gmra.mrb[0].mxu0 %v18
  %v373 = vpop.f32.mrb[0].mxu0
  %v374 = vadd.f32 %v299, %v373
  %v375 = vpop.f32.mrb[0].mxu0
  %376 = vmatprep.mubr.f32.mxu0 %v27
  %377 = vmatmul.mubr.f32.gmra.mrb[0].mxu0 %v26
  %v378 = vpop.f32.mrb[0].mxu0
  %v379 = vadd.f32 %v304, %v378
  %v380 = vpop.f32.mrb[0].mxu0
  %381 = vdwg.mxu0
  %382 = vmatprep.subr.mxu0 0.0
  %383 = vmatpush1.msra.mxu0 %v126
  %384 = vmatprep.subr.mxu0 0.0
  %385 = vmatpush1.msra.mxu0 %v127
  %386 = vmatprep.subr.mxu0 0.0
  %387 = vmatpush1.msra.mxu0 %v128
  %388 = vmatprep.subr.mxu0 0.0
  %389 = vmatpush1.msra.mxu0 %v129
  %390 = vmatprep.subr.mxu0 0.0
  %391 = vmatpush1.msra.mxu0 %v130
  %392 = vmatprep.subr.mxu0 0.0
  %393 = vmatpush1.msra.mxu0 %v131
  %394 = vmatprep.subr.mxu0 0.0
  %395 = vmatpush1.msra.mxu0 %v132
  %396 = vmatprep.subr.mxu0 0.0
  %397 = vmatpush1.msra.mxu0 %v133
  %398 = vmatprep.subr.mxu0 0.0
  %399 = vmatpush1.msra.mxu0 %v134
  %400 = vmatprep.subr.mxu0 0.0
  %401 = vmatpush1.msra.mxu0 %v135
  %402 = vmatprep.subr.mxu0 0.0
  %403 = vmatpush1.msra.mxu0 %v136
  %404 = vmatprep.subr.mxu0 0.0
  %405 = vmatpush1.msra.mxu0 %v137
  %406 = vmatprep.subr.mxu0 0.0
  %407 = vmatpush1.msra.mxu0 %v138
  %408 = vmatprep.subr.mxu0 0.0
  %409 = vmatpush1.msra.mxu0 %v139
  %410 = vmatprep.subr.mxu0 0.0
  %411 = vmatpush1.msra.mxu0 %v140
  %412 = vmatprep.subr.mxu0 0.0
  %413 = vmatpush1.msra.mxu0 %v141
  %414 = vmatprep.subr.mxu0 0.0
  %415 = vmatpush1.msra.mxu0 %v142
  %416 = vmatprep.subr.mxu0 0.0
  %417 = vmatpush1.msra.mxu0 %v143
  %418 = vmatprep.subr.mxu0 0.0
  %419 = vmatpush1.msra.mxu0 %v144
  %420 = vmatprep.subr.mxu0 0.0
  %421 = vmatpush1.msra.mxu0 %v145
  %422 = vmatprep.subr.mxu0 0.0
  %423 = vmatpush1.msra.mxu0 %v146
  %424 = vmatprep.subr.mxu0 0.0
  %425 = vmatpush1.msra.mxu0 %v147
  %426 = vmatprep.subr.mxu0 0.0
  %427 = vmatpush1.msra.mxu0 %v148
  %428 = vmatprep.subr.mxu0 0.0
  %429 = vmatpush1.msra.mxu0 %v149
  %430 = vmatprep.subr.mxu0 0.0
  %431 = vmatpush1.msra.mxu0 0.0
  %432 = vmatprep.subr.mxu0 0.0
  %433 = vmatpush1.msra.mxu0 0.0
  %434 = vmatprep.subr.mxu0 0.0
  %435 = vmatpush1.msra.mxu0 0.0
  %436 = vmatprep.subr.mxu0 0.0
  %437 = vmatpush1.msra.mxu0 0.0
  %438 = vmatprep.subr.mxu0 0.0
  %439 = vmatpush1.msra.mxu0 0.0
  %440 = vmatprep.subr.mxu0 0.0
  %441 = vmatpush1.msra.mxu0 0.0
  %442 = vmatprep.subr.mxu0 0.0
  %443 = vmatpush1.msra.mxu0 0.0
  %444 = vmatprep.subr.mxu0 0.0
  %445 = vmatpush1.msra.mxu0 0.0
  %446 = vmatprep.mubr.f32.mxu0 %v152
  %447 = vmatmul.mubr.f32.gmra.mrb[0].mxu0 %v20
  %v448 = vpop.f32.mrb[0].mxu0
  %v449 = vadd.f32 %v374, %v448
  %v450 = vpop.f32.mrb[0].mxu0
  %451 = vmatprep.mubr.f32.mxu0 %v155
  %452 = vmatmul.mubr.f32.gmra.mrb[0].mxu0 %v28
  %v453 = vpop.f32.mrb[0].mxu0
  %v454 = vadd.f32 %v379, %v453
  %v455 = vpop.f32.mrb[0].mxu0
  %456 = vdwg.mxu0
  %v457 = vmul.f32 %v449, %v449
  %v458 = vmul.f32 %v454, %v454
  %vm459 = vcmask 244736
  %v460 = vsel %vm459, %v457, 0.0
  %461 = vadd.xlane.f32.xlu0 %v460
  %v462 = vpop.xlane.xlu0 %461
  %v463 = vsel %vm459, %v458, 0.0
  %464 = vadd.xlane.f32.xlu0 %v463
  %v465 = vpop.xlane.xlu0 %464
  %v466 = vrsqrt.pop %v462
  %v467 = vmul.f32 %v462, %v466
  %vm468 = vcmp.eq.f32.partialorder %v462, inf
  %v469 = vsel %vm468, %v462, %v467
  %vm470 = vcmp.eq.f32.partialorder %v462, 0.0
  %v471 = vand.u32 %v462, 2147483648
  %v472 = vsel %vm470, %v471, %v469
  %v473 = vrsqrt.pop %v465
  %v474 = vmul.f32 %v465, %v473
  %vm475 = vcmp.eq.f32.partialorder %v465, inf
  %v476 = vsel %vm475, %v465, %v474
  %vm477 = vcmp.eq.f32.partialorder %v465, 0.0
  %v478 = vand.u32 %v465, 2147483648
  %v479 = vsel %vm477, %v478, %v476
  %v480 = vrot.slane %v472, 4
  %v481 = vadd.f32 %v472, %v480
  %v482 = vrot.slane %v481, 2
  %v483 = vadd.f32 %v481, %v482
  %v484 = vrot.slane %v483, 1
  %v485 = vadd.f32 %v483, %v484
  %v486 = vmul.f32 %v485, 0.125
  %v487 = vadd.f32 %v486, 1e-06
  %v488 = vrcp.pop %v487
  %v489 = vrot.slane %v479, 4
  %v490 = vadd.f32 %v479, %v489
  %v491 = vrot.slane %v490, 2
  %v492 = vadd.f32 %v490, %v491
  %v493 = vrot.slane %v492, 1
  %v494 = vadd.f32 %v492, %v493
  %v495 = vmul.f32 %v494, 0.125
  %v496 = vadd.f32 %v495, 1e-06
  %v497 = vrcp.pop %v496
  %v498 = vmul.f32 %v472, %v488
  %v499 = vmul.f32 %v479, %v497
  %v500 = vmul.f32 %v498, 0.7
  %v501 = vmul.f32 %v499, 0.7
  %v502 = vadd.f32 %v500, 0.3
  %v503 = vadd.f32 %v501, 0.3
  %505 = vset.pattern.permute.xlu0 0
  %506 = vperm.xlu0 %505, %v502
  %v507 = vpop.permute.xlu0 %506
  %510 = vset.pattern.permute.xlu0 0
  %511 = vperm.xlu0 %510, %v503
  %v512 = vpop.permute.xlu0 %511
  %v514 = vmul.f32 %v449, %v507
  %v515 = vmul.f32 %v454, %v512
  %517 = vrot.lane.b32.xlu0 %v515, 28
  %v518 = vpop.permute.xlu0 %517
  %vm520 = vcmask 228352
  %v521 = vsel %vm520, %v514, %v518
  %523 = vrot.lane.b32.xlu0 %v514, 127
  %v524 = vpop.permute.xlu0 %523
  %526 = vrot.lane.b32.xlu0 %v515, 27
  %v527 = vpop.permute.xlu0 %526
  %v529 = vsel %vm520, %v524, %v527
  %530 = vrot.lane.b32.xlu0 %v514, 126
  %v531 = vpop.permute.xlu0 %530
  %533 = vrot.lane.b32.xlu0 %v515, 26
  %v534 = vpop.permute.xlu0 %533
  %v536 = vsel %vm520, %v531, %v534
  %v537 = vld [vmem:[%s2] sm:$0xff]
  %v538 = vld [vmem:[%s2 + $0x8] sm:$0xff]
  %v539 = vld [vmem:[%s2 + $0x10] sm:$0xff]
  %v540 = vld [vmem:[%s2 + $0x18] sm:$0xff]
  %vm541 = vcmask 203776
  %v543 = vsel %vm541, %v537, 0
  %v546 = vsel %vm541, %v538, 0
  %v549 = vsel %vm541, %v539, 0
  %v552 = vsel %vm541, %v540, 0
  %vm554 = vcmask 1040384
  %v556 = vsel %vm554, 1.0, 0
  %558 = vmatprep.subr.mxu0 0.0
  %559 = vmatpush1.msra.mxu0 %v521
  %560 = vmatprep.subr.mxu0 0.0
  %561 = vmatpush1.msra.mxu0 %v529
  %562 = vmatprep.subr.mxu0 0.0
  %563 = vmatpush1.msra.mxu0 %v536
  %564 = vmatprep.subr.mxu0 0.0
  %565 = vmatpush1.msra.mxu0 %v556
  %566 = vmatprep.subr.mxu0 0.0
  %567 = vmatpush1.msra.mxu0 0.0
  %568 = vmatprep.subr.mxu0 0.0
  %569 = vmatpush1.msra.mxu0 0.0
  %570 = vmatprep.subr.mxu0 0.0
  %571 = vmatpush1.msra.mxu0 0.0
  %572 = vmatprep.subr.mxu0 0.0
  %573 = vmatpush1.msra.mxu0 0.0
  %574 = vmatprep.subr.mxu0 0.0
  %575 = vmatpush1.msra.mxu0 0.0
  %576 = vmatprep.subr.mxu0 0.0
  %577 = vmatpush1.msra.mxu0 0.0
  %578 = vmatprep.subr.mxu0 0.0
  %579 = vmatpush1.msra.mxu0 0.0
  %580 = vmatprep.subr.mxu0 0.0
  %581 = vmatpush1.msra.mxu0 0.0
  %582 = vmatprep.subr.mxu0 0.0
  %583 = vmatpush1.msra.mxu0 0.0
  %584 = vmatprep.subr.mxu0 0.0
  %585 = vmatpush1.msra.mxu0 0.0
  %586 = vmatprep.subr.mxu0 0.0
  %587 = vmatpush1.msra.mxu0 0.0
  %588 = vmatprep.subr.mxu0 0.0
  %589 = vmatpush1.msra.mxu0 0.0
  %590 = vmatprep.subr.mxu0 0.0
  %591 = vmatpush1.msra.mxu0 0.0
  %592 = vmatprep.subr.mxu0 0.0
  %593 = vmatpush1.msra.mxu0 0.0
  %594 = vmatprep.subr.mxu0 0.0
  %595 = vmatpush1.msra.mxu0 0.0
  %596 = vmatprep.subr.mxu0 0.0
  %597 = vmatpush1.msra.mxu0 0.0
  %598 = vmatprep.subr.mxu0 0.0
  %599 = vmatpush1.msra.mxu0 0.0
  %600 = vmatprep.subr.mxu0 0.0
  %601 = vmatpush1.msra.mxu0 0.0
  %602 = vmatprep.subr.mxu0 0.0
  %603 = vmatpush1.msra.mxu0 0.0
  %604 = vmatprep.subr.mxu0 0.0
  %605 = vmatpush1.msra.mxu0 0.0
  %606 = vmatprep.subr.mxu0 0.0
  %607 = vmatpush1.msra.mxu0 0.0
  %608 = vmatprep.subr.mxu0 0.0
  %609 = vmatpush1.msra.mxu0 0.0
  %610 = vmatprep.subr.mxu0 0.0
  %611 = vmatpush1.msra.mxu0 0.0
  %612 = vmatprep.subr.mxu0 0.0
  %613 = vmatpush1.msra.mxu0 0.0
  %614 = vmatprep.subr.mxu0 0.0
  %615 = vmatpush1.msra.mxu0 0.0
  %616 = vmatprep.subr.mxu0 0.0
  %617 = vmatpush1.msra.mxu0 0.0
  %618 = vmatprep.subr.mxu0 0.0
  %619 = vmatpush1.msra.mxu0 0.0
  %620 = vmatprep.subr.mxu0 0.0
  %621 = vmatpush1.msra.mxu0 0.0
  %622 = vmatprep.mubr.f32.mxu0 0.0
  %623 = vmatmul.mubr.f32.gmra.mrb[0].mxu0 %v543
  %v624 = vpop.f32.mrb[0].mxu0
  %v625 = vadd.f32 0.0, %v624
  %v626 = vpop.f32.mrb[0].mxu0
  %627 = vmatprep.mubr.f32.mxu0 0.0
  %628 = vmatmul.mubr.f32.gmra.mrb[0].mxu0 %v546
  %v629 = vpop.f32.mrb[0].mxu0
  %v630 = vadd.f32 0.0, %v629
  %v631 = vpop.f32.mrb[0].mxu0
  %632 = vmatprep.mubr.f32.mxu0 0.0
  %633 = vmatmul.mubr.f32.gmra.mrb[0].mxu0 %v549
  %v634 = vpop.f32.mrb[0].mxu0
  %v635 = vadd.f32 0.0, %v634
  %v636 = vpop.f32.mrb[0].mxu0
  %637 = vmatprep.mubr.f32.mxu0 0.0
  %638 = vmatmul.mubr.f32.gmra.mrb[0].mxu0 %v552
  %v639 = vpop.f32.mrb[0].mxu0
  %v640 = vadd.f32 0.0, %v639
  %v641 = vpop.f32.mrb[0].mxu0
  %642 = vdwg.mxu0
  %vm643 = vcmask 457728
  %644 = vst.msk [vmem:[%s3] sm:$0xff] %vm643, %v625
  %645 = vst.msk [vmem:[%s3 + $0x8] sm:$0xff] %vm643, %v630
  %646 = vst.msk [vmem:[%s3 + $0x10] sm:$0xff] %vm643, %v635
  %647 = vst.msk [vmem:[%s3 + $0x18] sm:$0xff] %vm643, %v640
  // Predicated region
  $region14: #{get_mutiaxis_decoder_shuffle_fea.1} parent=0 // pred_check
    _
  $region15: #{get_mutiaxis_decoder_shuffle_fea.1} parent=0 // pred_check_branch
    %649 = sbr.rel (0) target = $region17
  $region16: #{get_mutiaxis_decoder_shuffle_fea.1} parent=0 // pred_region
    _
  $region17: #{get_mutiaxis_decoder_shuffle_fea.1} parent=0 // pred_fallthru
    _
  // Predicated region
  $region18: #{get_mutiaxis_decoder_shuffle_fea.1} parent=0 // pred_check
    _
  $region19: #{get_mutiaxis_decoder_shuffle_fea.1} parent=0 // pred_check_branch
    %651 = sbr.rel (0) target = $region21
  $region20: #{get_mutiaxis_decoder_shuffle_fea.1} parent=0 // pred_region
    _
  $region21: #{get_mutiaxis_decoder_shuffle_fea.1} parent=0 // pred_fallthru
    _

</llo_original>
